<compile_context>
chip_gen: v7x
topology: tpu7x:2x2x1
jax: 0.10.0
libtpu: 0.0.40
codegen_flags: <defaults>
</compile_context>

<pallas_src>
import functools

import jax
import jax.numpy as jnp
import numpy as np
from jax.experimental import pallas as pl
from jax.experimental.pallas import tpu as pltpu


# ----------------------------------------------------------------------------
# Pallas kernel: one grid step = one batch block, everything fused.
# ----------------------------------------------------------------------------
def _bottleneck_kernel(x_ref, vin_ref, vp_ref, vout_ref,
                       w1_ref, w2_ref, w3_ref, out_ref, *, H):
    """bn1+relu+conv1 -> bn2+relu+conv2(3x3) -> bn3+relu+conv3 -> + identity.

    x_ref    : (R, W*Cin)       f32, R = batch_block * H
    vin_ref  : (2, W*Cin)       f32: [s1, o1] tiled along W
    vp_ref   : (4, W*P)         f32: [s2, o2+b1*s2, s3, o3+b2*s3] tiled
    vout_ref : (1, W*Cout)      f32: [b3] tiled
    w1_ref   : (W*Cin, W*P)     block-diagonal 1x1 weight (MXU dtype)
    w2_ref   : (3*W*P, W*P)     banded 3x3 weights stacked over ky (MXU dtype)
    w3_ref   : (W*P, W*Cout)    block-diagonal 1x1 weight (MXU dtype)
    out_ref  : (R, W*Cout)      f32
    """
    f32 = jnp.float32
    mxu = w1_ref.dtype
    R = x_ref.shape[0]

    x = x_ref[...]                                            # (R, WCin) f32

    # ---- bn1 + relu + conv1 (1x1 block-diag matmul; bias folded into o2') ---
    a = jnp.maximum(x * vin_ref[0:1, :] + vin_ref[1:2, :], 0.0)
    h = jnp.dot(a.astype(mxu), w1_ref[...], preferred_element_type=f32)

    # ---- bn2 + relu ----------------------------------------------------------
    a = jnp.maximum(h * vp_ref[0:1, :] + vp_ref[1:2, :], 0.0)   # (R, WP) f32

    # ---- conv2 (3x3, stride 1, padding 1) ------------------------------------
    # dy = +-1 via sublane rolls (XLU) + per-image boundary masking; the dx
    # taps and x zero-padding are folded into the banded weights.  All three
    # ky taps fused into one K = 3*WP matmul.
    rmod = jax.lax.broadcasted_iota(jnp.int32, (R, 1), 0) % H
    a_up = jnp.where(rmod == 0, 0.0,
                     pltpu.roll(a, 1, axis=0))                  # a[r-1]
    a_dn = jnp.where(rmod == H - 1, 0.0,
                     pltpu.roll(a, R - 1, axis=0))              # a[r+1]
    a_cat = jnp.concatenate([a_up, a, a_dn], axis=-1).astype(mxu)  # (R, 3*WP)
    h = jnp.dot(a_cat, w2_ref[...], preferred_element_type=f32)    # (R, WP)

    # ---- bn3 + relu + conv3 (1x1 block-diag) + b3 + identity residual --------
    a = jnp.maximum(h * vp_ref[2:3, :] + vp_ref[3:4, :], 0.0)
    h = jnp.dot(a.astype(mxu), w3_ref[...], preferred_element_type=f32)
    out_ref[...] = (h + vout_ref[0:1, :] + x).astype(out_ref.dtype)


# ----------------------------------------------------------------------------
# Parameter packing (wrapper-side layout plumbing)
# ----------------------------------------------------------------------------
def _pack_params(p, W, mxu_dtype):
    Cin, P = p["w1"].shape
    Cout = p["w3"].shape[1]
    del Cin, Cout  # only used for clarity

    def tiled(v):
        return jnp.tile(jnp.asarray(v, jnp.float32).reshape(-1), W)

    # Fold conv biases into the *next* BN shift (legal: only the conv bias is
    # folded, not the BN scale across the ReLU).
    o2f = p["o2"] + p["b1"] * p["s2"]
    o3f = p["o3"] + p["b2"] * p["s3"]

    vin = jnp.stack([tiled(p["s1"]), tiled(p["o1"])], axis=0)    # (2, WCin)
    vp = jnp.stack([tiled(p["s2"]), tiled(o2f),
                    tiled(p["s3"]), tiled(o3f)], axis=0)         # (4, WP)
    vout = tiled(p["b3"]).reshape(1, -1)                         # (1, WCout)

    eye_w = jnp.eye(W, dtype=jnp.float32)
    bigw1 = jnp.kron(eye_w, p["w1"]).astype(mxu_dtype)           # (WCin, WP)
    bigw3 = jnp.kron(eye_w, p["w3"]).astype(mxu_dtype)           # (WP, WCout)

    def band(w2_ky):  # w2_ky: (3, P, P) = [kx, cin, cout] -> (WP, WP) banded
        return sum(jnp.kron(jnp.eye(W, k=-(kx - 1), dtype=jnp.float32),
                            w2_ky[kx]) for kx in range(3))

    # Stack the three ky bands vertically -> single (3*WP, WP) operand so
    # conv2 is ONE K=3*WP matmul against [a_up | a | a_dn].
    bigw2 = jnp.concatenate([band(p["w2"][ky]) for ky in range(3)],
                            axis=0).astype(mxu_dtype)            # (3*WP, WP)
    return vin, vp, vout, bigw1, bigw2, bigw3


# ----------------------------------------------------------------------------
# Wrapper: NCHW in -> NCHW out
# ----------------------------------------------------------------------------
def bottleneck2d_forward(x_nchw, p, *, batch_block=None,
                         mxu_dtype=jnp.bfloat16):
    N, Cin, H, W = x_nchw.shape
    P = p["w1"].shape[1]
    Cout = 2 * P
    assert Cin == Cout, "identity residual requires inplanes == 2 * planes"

    WCin, WP, WCout = W * Cin, W * P, W * Cout
    vin, vp, vout, bigw1, bigw2, bigw3 = _pack_params(p, W, mxu_dtype)

    # NCHW -> (N*H, W*Cin): rows on sublanes, (W, C) flattened on lanes.
    x2d = jnp.transpose(x_nchw, (0, 2, 3, 1)).reshape(N * H, WCin)
    x2d = x2d.astype(jnp.float32)

    if batch_block is None:
        # Heuristic: ~256 rows per grid step (fills the 256-row MXU pass on
        # v6e/v7x), but keep the grid length >= 2 so software pipelining and
        # v7x megacore ("parallel") can actually engage.
        target = max(1, 256 // H)
        if N >= 2:
            target = min(target, max(1, N // 2))
        nb = max(d for d in range(1, N + 1) if N % d == 0 and d <= target)
    else:
        nb = batch_block
    assert N % nb == 0
    rows = nb * H                                  # rows per grid step
    grid_len = N // nb

    kernel = functools.partial(_bottleneck_kernel, H=H)

    # Explicit VMEM budget: double-buffered x/out streams + resident weights
    # + live (rows, <=3*WP) f32 intermediates, with 2x headroom; clamped to a
    # v7x-safe ceiling (64 MiB physical VMEM there).
    wbytes = jnp.dtype(mxu_dtype).itemsize
    est = (2 * 2 * rows * (WCin + WCout) * 4
           + (bigw1.size + bigw2.size + bigw3.size) * wbytes
           + (vin.size + vp.size + vout.size) * 4
           + 6 * rows * 3 * WP * 4)
    vmem_limit = int(min(max(2 * est, 32 * 1024 * 1024), 48 * 1024 * 1024))

    out2d = pl.pallas_call(
        kernel,
        out_shape=jax.ShapeDtypeStruct((N * H, WCout), jnp.float32),
        grid_spec=pltpu.PrefetchScalarGridSpec(
            num_scalar_prefetch=0,
            grid=(grid_len,),
            in_specs=[
                pl.BlockSpec((rows, WCin), lambda b: (b, 0)),
                pl.BlockSpec((2, WCin), lambda b: (0, 0)),
                pl.BlockSpec((4, WP), lambda b: (0, 0)),
                pl.BlockSpec((1, WCout), lambda b: (0, 0)),
                pl.BlockSpec((WCin, WP), lambda b: (0, 0)),
                pl.BlockSpec((3 * WP, WP), lambda b: (0, 0)),
                pl.BlockSpec((WP, WCout), lambda b: (0, 0)),
            ],
            out_specs=pl.BlockSpec((rows, WCout), lambda b: (b, 0)),
        ),
        # Batch blocks are independent -> shardable across v7x's 2 TensorCores
        # (grid_len >= 2); neutral on single-core v5e / v6e.
        compiler_params=pltpu.CompilerParams(
            dimension_semantics=("parallel",),
            vmem_limit_bytes=vmem_limit),
    )(x2d, vin, vp, vout, bigw1, bigw2, bigw3)

    out = out2d.reshape(N, H, W, Cout)
    return jnp.transpose(out, (0, 3, 1, 2))        # back to NCHW


# ----------------------------------------------------------------------------
# Deterministic parameter construction (BatchNorm folded to scale/shift)
# ----------------------------------------------------------------------------
def init_params(key, inplanes, planes):
    eps = 1e-5
    ks = jax.random.split(key, 18)

    def bn_fold(kg, kb, km, kv, c):
        gamma = 1.0 + 0.1 * jax.random.normal(kg, (c,), jnp.float32)
        beta = 0.1 * jax.random.normal(kb, (c,), jnp.float32)
        rmean = 0.1 * jax.random.normal(km, (c,), jnp.float32)
        rvar = 1.0 + 0.1 * jnp.abs(jax.random.normal(kv, (c,), jnp.float32))
        scale = gamma / jnp.sqrt(rvar + eps)
        shift = beta - rmean * scale
        return scale, shift

    s1, o1 = bn_fold(ks[0], ks[1], ks[2], ks[3], inplanes)
    s2, o2 = bn_fold(ks[4], ks[5], ks[6], ks[7], planes)
    s3, o3 = bn_fold(ks[8], ks[9], ks[10], ks[11], planes)

    w1 = 0.1 * jax.random.normal(ks[12], (inplanes, planes), jnp.float32)
    b1 = 0.1 * jax.random.normal(ks[13], (planes,), jnp.float32)
    w2 = 0.1 * jax.random.normal(ks[14], (3, 3, planes, planes), jnp.float32)
    b2 = 0.1 * jax.random.normal(ks[15], (planes,), jnp.float32)
    w3 = 0.1 * jax.random.normal(ks[16], (planes, 2 * planes), jnp.float32)
    b3 = 0.1 * jax.random.normal(ks[17], (2 * planes,), jnp.float32)

    return dict(s1=s1, o1=o1, w1=w1, b1=b1,
                s2=s2, o2=o2, w2=w2, b2=b2,
                s3=s3, o3=o3, w3=w3, b3=b3)


# ----------------------------------------------------------------------------
# Pure-JAX reference (same semantics) for a correctness check
# ----------------------------------------------------------------------------
def reference_forward(x_nchw, p):
    prec = jax.lax.Precision.HIGHEST
    x = jnp.transpose(x_nchw, (0, 2, 3, 1))       # NHWC

    def bn_relu(t, s, o):
        return jnp.maximum(
            t * s.reshape(1, 1, 1, -1) + o.reshape(1, 1, 1, -1), 0.0)

    def conv(t, w_hwio, b, padding):
        y = jax.lax.conv_general_dilated(
            t, w_hwio, (1, 1), padding,
            dimension_numbers=("NHWC", "HWIO", "NHWC"), precision=prec)
        return y + b.reshape(1, 1, 1, -1)

    a = bn_relu(x, p["s1"], p["o1"])
    a = conv(a, p["w1"].reshape(1, 1, *p["w1"].shape), p["b1"], "VALID")
    a = bn_relu(a, p["s2"], p["o2"])
    a = conv(a, p["w2"], p["b2"], "SAME")
    a = bn_relu(a, p["s3"], p["o3"])
    a = conv(a, p["w3"].reshape(1, 1, *p["w3"].shape), p["b3"], "VALID")
    out = a + x
    return jnp.transpose(out, (0, 3, 1, 2))        # back to NCHW


# ----------------------------------------------------------------------------
if __name__ == "__main__":
    key = jax.random.PRNGKey(0)
    kx, kp = jax.random.split(key)

    # Module config: Bottleneck2D(inplanes=8, planes=4, stride=1, downsample=None)
    N, H, W = 2, 16, 16
    inplanes, planes = 8, 4            # inplanes == planes * expansion (= 2)

    # PyTorch-style NCHW input.
    x_nchw = jax.random.normal(kx, (N, inplanes, H, W), jnp.float32)
    params = init_params(kp, inplanes, planes)

    out = bottleneck2d_forward(x_nchw, params)
    jax.block_until_ready(out)

    ref = reference_forward(x_nchw, params)
    # bf16 MXU operands (f32 accumulation) vs. a Precision.HIGHEST f32
    # reference -> loose tolerance.
    np.testing.assert_allclose(np.asarray(out), np.asarray(ref),
                               rtol=1e-2, atol=1e-2)

    print("KERNEL_OK")
</pallas_src>

<mosaic_0001>
module attributes {stable_mosaic.version = 11 : i64} {
  func.func @_bottleneck_kernel(%arg0: i32, %arg1: memref<16x128xf32, #tpu.memory_space<vmem>>, %arg2: memref<2x128xf32, #tpu.memory_space<vmem>>, %arg3: memref<4x64xf32, #tpu.memory_space<vmem>>, %arg4: memref<1x128xf32, #tpu.memory_space<vmem>>, %arg5: memref<128x64xbf16, #tpu.memory_space<vmem>>, %arg6: memref<192x64xbf16, #tpu.memory_space<vmem>>, %arg7: memref<64x128xbf16, #tpu.memory_space<vmem>>, %arg8: memref<16x128xf32, #tpu.memory_space<vmem>>) attributes {dimension_semantics = [#tpu.dimension_semantics<parallel>], iteration_bounds = array<i64: 2>, scalar_prefetch = 0 : i64, scratch_operands = 0 : i64, tpu.core_type = #tpu.core_type<tc>, window_params = [{transform_indices = @transform_0, window_bounds = array<i64: 16, 128>}, {pipeline_mode = #tpu.pipeline_mode<synchronous>, transform_indices = @transform_1, window_bounds = array<i64: 2, 128>}, {pipeline_mode = #tpu.pipeline_mode<synchronous>, transform_indices = @transform_2, window_bounds = array<i64: 4, 64>}, {pipeline_mode = #tpu.pipeline_mode<synchronous>, transform_indices = @transform_3, window_bounds = array<i64: 1, 128>}, {pipeline_mode = #tpu.pipeline_mode<synchronous>, transform_indices = @transform_4, window_bounds = array<i64: 128, 64>}, {pipeline_mode = #tpu.pipeline_mode<synchronous>, transform_indices = @transform_5, window_bounds = array<i64: 192, 64>}, {pipeline_mode = #tpu.pipeline_mode<synchronous>, transform_indices = @transform_6, window_bounds = array<i64: 64, 128>}, {transform_indices = @transform_7, window_bounds = array<i64: 16, 128>}]} {
    %c0 = arith.constant 0 : index
    %c0_0 = arith.constant 0 : index
    %0 = vector.load %arg1[%c0, %c0_0] : memref<16x128xf32, #tpu.memory_space<vmem>>, vector<16x128xf32>
    %c0_1 = arith.constant 0 : index
    %c0_2 = arith.constant 0 : index
    %1 = vector.load %arg2[%c0_1, %c0_2] : memref<2x128xf32, #tpu.memory_space<vmem>>, vector<1x128xf32>
    %2 = vector.broadcast %1 : vector<1x128xf32> to vector<16x128xf32>
    %3 = arith.mulf %0, %2 : vector<16x128xf32>
    %c1 = arith.constant 1 : index
    %c0_3 = arith.constant 0 : index
    %4 = vector.load %arg2[%c1, %c0_3] : memref<2x128xf32, #tpu.memory_space<vmem>>, vector<1x128xf32>
    %5 = vector.broadcast %4 : vector<1x128xf32> to vector<16x128xf32>
    %6 = arith.addf %3, %5 : vector<16x128xf32>
    %cst = arith.constant 0.000000e+00 : f32
    %7 = vector.broadcast %cst : f32 to vector<16x128xf32>
    %8 = arith.maximumf %6, %7 : vector<16x128xf32>
    %9 = arith.truncf %8 : vector<16x128xf32> to vector<16x128xbf16>
    %c0_4 = arith.constant 0 : index
    %c0_5 = arith.constant 0 : index
    %10 = vector.load %arg5[%c0_4, %c0_5] : memref<128x64xbf16, #tpu.memory_space<vmem>>, vector<128x64xbf16>
    %cst_6 = arith.constant dense<0.000000e+00> : vector<16x64xf32>
    %11 = tpu.matmul %9, %10, %cst_6 {dimension_numbers = #tpu.dot_dimension_numbers<[1], [0], [0], [1], [0, 0, 1, 1], [], []>} : vector<16x128xbf16>, vector<128x64xbf16>, vector<16x64xf32> -> vector<16x64xf32>
    %c0_7 = arith.constant 0 : index
    %c0_8 = arith.constant 0 : index
    %12 = vector.load %arg3[%c0_7, %c0_8] : memref<4x64xf32, #tpu.memory_space<vmem>>, vector<1x64xf32>
    %13 = vector.broadcast %12 : vector<1x64xf32> to vector<16x64xf32>
    %14 = arith.mulf %11, %13 : vector<16x64xf32>
    %c1_9 = arith.constant 1 : index
    %c0_10 = arith.constant 0 : index
    %15 = vector.load %arg3[%c1_9, %c0_10] : memref<4x64xf32, #tpu.memory_space<vmem>>, vector<1x64xf32>
    %16 = vector.broadcast %15 : vector<1x64xf32> to vector<16x64xf32>
    %17 = arith.addf %14, %16 : vector<16x64xf32>
    %cst_11 = arith.constant 0.000000e+00 : f32
    %18 = vector.broadcast %cst_11 : f32 to vector<16x64xf32>
    %19 = arith.maximumf %17, %18 : vector<16x64xf32>
    %20 = tpu.iota {dimensions = array<i32: 0>} : vector<16x1xi32>
    %c16_i32 = arith.constant 16 : i32
    %c0_i32 = arith.constant 0 : i32
    %21 = arith.cmpi eq, %c16_i32, %c0_i32 : i32
    %c1_i32 = arith.constant 1 : i32
    %22 = arith.select %21, %c1_i32, %c16_i32 : i32
    %23 = vector.broadcast %22 : i32 to vector<16x1xi32>
    %24 = arith.remsi %20, %23 : vector<16x1xi32>
    %c0_i32_12 = arith.constant 0 : i32
    %25 = vector.broadcast %c0_i32_12 : i32 to vector<16x1xi32>
    %26 = arith.cmpi ne, %24, %25 : vector<16x1xi32>
    %c0_i32_13 = arith.constant 0 : i32
    %27 = vector.broadcast %c0_i32_13 : i32 to vector<16x1xi32>
    %28 = arith.cmpi slt, %24, %27 : vector<16x1xi32>
    %c0_i32_14 = arith.constant 0 : i32
    %29 = arith.cmpi slt, %22, %c0_i32_14 : i32
    %30 = vector.broadcast %29 : i1 to vector<16x1xi1>
    %31 = vector.broadcast %30 : vector<16x1xi1> to vector<16x1xi1>
    %32 = arith.xori %28, %31 : vector<16x1xi1>
    %33 = arith.andi %32, %26 : vector<16x1xi1>
    %34 = vector.broadcast %22 : i32 to vector<16x1xi32>
    %35 = arith.addi %24, %34 : vector<16x1xi32>
    %36 = arith.select %33, %35, %24 : vector<16x1xi1>, vector<16x1xi32>
    %c0_i32_15 = arith.constant 0 : i32
    %37 = vector.broadcast %c0_i32_15 : i32 to vector<16x1xi32>
    %38 = arith.cmpi eq, %36, %37 : vector<16x1xi32>
    %c1_i32_16 = arith.constant 1 : i32
    %39 = tpu.dynamic_rotate %19 by %c1_i32_16 dim 0 : vector<16x64xf32>, i32 -> vector<16x64xf32>
    %cst_17 = arith.constant 0.000000e+00 : f32
    %40 = vector.shape_cast %38 : vector<16x1xi1> to vector<16x1xi1>
    %41 = vector.broadcast %40 : vector<16x1xi1> to vector<16x64xi1>
    %42 = vector.broadcast %cst_17 : f32 to vector<16x64xf32>
    %43 = arith.select %41, %42, %39 : vector<16x64xi1>, vector<16x64xf32>
    %c15_i32 = arith.constant 15 : i32
    %44 = vector.broadcast %c15_i32 : i32 to vector<16x1xi32>
    %45 = arith.cmpi eq, %36, %44 : vector<16x1xi32>
    %c15_i32_18 = arith.constant 15 : i32
    %46 = tpu.dynamic_rotate %19 by %c15_i32_18 dim 0 : vector<16x64xf32>, i32 -> vector<16x64xf32>
    %cst_19 = arith.constant 0.000000e+00 : f32
    %47 = vector.shape_cast %45 : vector<16x1xi1> to vector<16x1xi1>
    %48 = vector.broadcast %47 : vector<16x1xi1> to vector<16x64xi1>
    %49 = vector.broadcast %cst_19 : f32 to vector<16x64xf32>
    %50 = arith.select %48, %49, %46 : vector<16x64xi1>, vector<16x64xf32>
    %51 = tpu.concatenate %43, %19, %50 in 1 : vector<16x64xf32>, vector<16x64xf32>, vector<16x64xf32> -> vector<16x192xf32>
    %52 = arith.truncf %51 : vector<16x192xf32> to vector<16x192xbf16>
    %c0_20 = arith.constant 0 : index
    %c0_21 = arith.constant 0 : index
    %53 = vector.load %arg6[%c0_20, %c0_21] : memref<192x64xbf16, #tpu.memory_space<vmem>>, vector<192x64xbf16>
    %cst_22 = arith.constant dense<0.000000e+00> : vector<16x64xf32>
    %54 = tpu.matmul %52, %53, %cst_22 {dimension_numbers = #tpu.dot_dimension_numbers<[1], [0], [0], [1], [0, 0, 1, 1], [], []>} : vector<16x192xbf16>, vector<192x64xbf16>, vector<16x64xf32> -> vector<16x64xf32>
    %c2 = arith.constant 2 : index
    %c0_23 = arith.constant 0 : index
    %55 = vector.load %arg3[%c2, %c0_23] : memref<4x64xf32, #tpu.memory_space<vmem>>, vector<1x64xf32>
    %56 = vector.broadcast %55 : vector<1x64xf32> to vector<16x64xf32>
    %57 = arith.mulf %54, %56 : vector<16x64xf32>
    %c3 = arith.constant 3 : index
    %c0_24 = arith.constant 0 : index
    %58 = vector.load %arg3[%c3, %c0_24] : memref<4x64xf32, #tpu.memory_space<vmem>>, vector<1x64xf32>
    %59 = vector.broadcast %58 : vector<1x64xf32> to vector<16x64xf32>
    %60 = arith.addf %57, %59 : vector<16x64xf32>
    %cst_25 = arith.constant 0.000000e+00 : f32
    %61 = vector.broadcast %cst_25 : f32 to vector<16x64xf32>
    %62 = arith.maximumf %60, %61 : vector<16x64xf32>
    %63 = arith.truncf %62 : vector<16x64xf32> to vector<16x64xbf16>
    %c0_26 = arith.constant 0 : index
    %c0_27 = arith.constant 0 : index
    %64 = vector.load %arg7[%c0_26, %c0_27] : memref<64x128xbf16, #tpu.memory_space<vmem>>, vector<64x128xbf16>
    %cst_28 = arith.constant dense<0.000000e+00> : vector<16x128xf32>
    %65 = tpu.matmul %63, %64, %cst_28 {dimension_numbers = #tpu.dot_dimension_numbers<[1], [0], [0], [1], [0, 0, 1, 1], [], []>} : vector<16x64xbf16>, vector<64x128xbf16>, vector<16x128xf32> -> vector<16x128xf32>
    %c0_29 = arith.constant 0 : index
    %c0_30 = arith.constant 0 : index
    %66 = vector.load %arg4[%c0_29, %c0_30] : memref<1x128xf32, #tpu.memory_space<vmem>>, vector<1x128xf32>
    %67 = vector.broadcast %66 : vector<1x128xf32> to vector<16x128xf32>
    %68 = arith.addf %65, %67 : vector<16x128xf32>
    %69 = arith.addf %68, %0 : vector<16x128xf32>
    %c0_31 = arith.constant 0 : index
    %c0_32 = arith.constant 0 : index
    %70 = vector.load %arg8[%c0_31, %c0_32] : memref<16x128xf32, #tpu.memory_space<vmem>>, vector<16x128xf32>
    tpu.vector_store %arg8[%c0_31, %c0_32], %69 {strides = array<i32>} : memref<16x128xf32, #tpu.memory_space<vmem>>, vector<16x128xf32>,
    return
  }
  func.func @transform_0(%arg0: i32) -> (i32, i32) {
    %c0_i32 = arith.constant 0 : i32
    %c0_i32_0 = arith.constant 0 : i32
    return %arg0, %c0_i32 : i32, i32
  }
  func.func @transform_1(%arg0: i32) -> (i32, i32) {
    %c0_i32 = arith.constant 0 : i32
    %c0_i32_0 = arith.constant 0 : i32
    %c0_i32_1 = arith.constant 0 : i32
    return %c0_i32, %c0_i32_0 : i32, i32
  }
  func.func @transform_2(%arg0: i32) -> (i32, i32) {
    %c0_i32 = arith.constant 0 : i32
    %c0_i32_0 = arith.constant 0 : i32
    %c0_i32_1 = arith.constant 0 : i32
    return %c0_i32, %c0_i32_0 : i32, i32
  }
  func.func @transform_3(%arg0: i32) -> (i32, i32) {
    %c0_i32 = arith.constant 0 : i32
    %c0_i32_0 = arith.constant 0 : i32
    %c0_i32_1 = arith.constant 0 : i32
    return %c0_i32, %c0_i32_0 : i32, i32
  }
  func.func @transform_4(%arg0: i32) -> (i32, i32) {
    %c0_i32 = arith.constant 0 : i32
    %c0_i32_0 = arith.constant 0 : i32
    %c0_i32_1 = arith.constant 0 : i32
    return %c0_i32, %c0_i32_0 : i32, i32
  }
  func.func @transform_5(%arg0: i32) -> (i32, i32) {
    %c0_i32 = arith.constant 0 : i32
    %c0_i32_0 = arith.constant 0 : i32
    %c0_i32_1 = arith.constant 0 : i32
    return %c0_i32, %c0_i32_0 : i32, i32
  }
  func.func @transform_6(%arg0: i32) -> (i32, i32) {
    %c0_i32 = arith.constant 0 : i32
    %c0_i32_0 = arith.constant 0 : i32
    %c0_i32_1 = arith.constant 0 : i32
    return %c0_i32, %c0_i32_0 : i32, i32
  }
  func.func @transform_7(%arg0: i32) -> (i32, i32) {
    %c0_i32 = arith.constant 0 : i32
    %c0_i32_0 = arith.constant 0 : i32
    return %arg0, %c0_i32 : i32, i32
  }
}

</mosaic_0001>

<llo_original>
// kernel: tpu_custom_call.1
$region0: #{tpu_custom_call.1}
  #allocation0 [shape = 'u32[]', space=smem, size = 0x4, offset = 0x4, fixed_abs, tag = 'smem constant byte address 0x4 - core index']
  #allocation1 [shape = 'u32[144,128]{1,0:T(1,128)}', space=vmem, size = 0x12000, scoped, tag = 'internal scratch']
  %s0 = inlined_call_operand.vmem [shape: f32[32,128], index: 0, kind: input, shape index: {}]
  %s1 = inlined_call_operand.vmem [shape: f32[2,128], index: 1, kind: input, shape index: {}]
  %s2 = inlined_call_operand.vmem [shape: f32[4,64], index: 2, kind: input, shape index: {}]
  %s3 = inlined_call_operand.vmem [shape: f32[1,128], index: 3, kind: input, shape index: {}]
  %s4 = inlined_call_operand.vmem [shape: bf16[128,64], index: 4, kind: input, shape index: {}]
  %s5 = inlined_call_operand.vmem [shape: bf16[192,64], index: 5, kind: input, shape index: {}]
  %s6 = inlined_call_operand.vmem [shape: bf16[64,128], index: 6, kind: input, shape index: {}]
  %s7 = inlined_call_operand.hbm [shape: f32[32,128], index: 7, kind: output, shape index: {}]
  %s8 = sld [smem:[#allocation0]]
  $region61: #{tpu_custom_call.1} parent=0
    _
  %s10 = ssub.s32 1, %s8
  %s11 = scalar_select 0, %s10, %s8
  $region1: #{tpu_custom_call.1} parent=0
    #allocation2 [shape = 'u8[16384]{0}', space=vmem, size = 0x4000, scoped, tag = 'output window, operand 0']
    #allocation3 [shape = 's32[2]{0}', space=sflag, size = 0x8, scoped, tag = 'scoped memory for tpu_custom_call.1']
    %12 = vsyncpa [#allocation3], 0
    %s13 = scalar_lea.sflag [#allocation3], 1
    %14 = vsyncpa %s13, 0
    loop: start=0, step=1, limit=4
    $region2: #{tpu_custom_call.1} parent=1 // loop_pre_header
      _
    $region3: #{tpu_custom_call.1} parent=1 // loop_header
      %s16 = sphi 0, %s20
      %p17 = scmp.ge.s32.totalorder %s16, 4
      %s26 = sphi 0, %s28
      %s29 = sphi 0, %s26
      %s30 = sphi 0, %s29
      %s46 = sphi 0, %s30
      %s50 = sphi 0, %s50
      %s52 = sphi 0, %s50
      %s53 = sphi 0, %s52
      %s67 = sphi 0, %s53
      %s71 = sphi 0, %s71
      %s73 = sphi 0, %s71
      %s74 = sphi 0, %s73
      %s88 = sphi 0, %s74
      %s92 = sphi 0, %s92
      %s94 = sphi 0, %s92
      %s95 = sphi 0, %s94
      %s109 = sphi 0, %s95
      %s113 = sphi 0, %s113
      %s115 = sphi 0, %s113
      %s116 = sphi 0, %s115
      %s130 = sphi 0, %s116
      %s134 = sphi 0, %s134
      %s136 = sphi 0, %s134
      %s137 = sphi 0, %s136
      %s151 = sphi 0, %s137
      %s155 = sphi 0, %s155
      %s157 = sphi 0, %s155
      %s158 = sphi 0, %s157
      %s172 = sphi 0, %s158
      %s178 = sphi 0, %s180
      %s181 = sphi 0, %s178
      %s182 = sphi 0, %s181
      %s198 = sphi 0, %s182
    $region4: #{tpu_custom_call.1} parent=1 // loop_header_branch
      %19 = sbr.rel (%p17) target = $region8
    $region5: #{tpu_custom_call.1} parent=1 // loop_body
      %s21 = ssub.s32 %s16, 1
      %s22 = ssub.s32 %s16, 2
      %s23 = sadd.s32 %s16, 1
      %s24 = ssub.s32 %s16, %s23
      %p25 = scmp.eq.s32.totalorder %s24, 0
      %s27 = sadd.s32 %s26, 1
      %s28 = scalar_select %p25, %s26, %s27
      %p31 = pneg %p25
      %p32 = scmp.eq.s32.totalorder %s16, 1
      %p33 = por %p31, %p32
      %p34 = scmp.ne.s32.totalorder %s26, %s29
      %p35 = scmp.eq.s32.totalorder %s16, 0
      %p36 = por %p34, %p35
      %p37 = scmp.ne.s32.totalorder %s26, %s29
      %p38 = scmp.eq.s32.totalorder %s21, 1
      %p39 = por %p37, %p38
      %p40 = scmp.ne.s32.totalorder %s29, %s30
      %p41 = scmp.eq.s32.totalorder %s21, 0
      %p42 = por %p40, %p41
      %p43 = scmp.ne.s32.totalorder %s29, %s30
      %p44 = scmp.eq.s32.totalorder %s22, 1
      %p45 = por %p43, %p44
      %p47 = scmp.ne.s32.totalorder %s30, %s46
      %p48 = scmp.eq.s32.totalorder %s22, 0
      %p49 = por %p47, %p48
      %s51 = sadd.s32 %s50, 1
      %p54 = scmp.eq.s32.totalorder %s16, 1
      %p55 = scmp.ne.s32.totalorder %s50, %s52
      %p56 = scmp.eq.s32.totalorder %s16, 0
      %p57 = por %p55, %p56
      %p58 = scmp.ne.s32.totalorder %s50, %s52
      %p59 = scmp.eq.s32.totalorder %s21, 1
      %p60 = por %p58, %p59
      %p61 = scmp.ne.s32.totalorder %s52, %s53
      %p62 = scmp.eq.s32.totalorder %s21, 0
      %p63 = por %p61, %p62
      %p64 = scmp.ne.s32.totalorder %s52, %s53
      %p65 = scmp.eq.s32.totalorder %s22, 1
      %p66 = por %p64, %p65
      %p68 = scmp.ne.s32.totalorder %s53, %s67
      %p69 = scmp.eq.s32.totalorder %s22, 0
      %p70 = por %p68, %p69
      %s72 = sadd.s32 %s71, 1
      %p75 = scmp.eq.s32.totalorder %s16, 1
      %p76 = scmp.ne.s32.totalorder %s71, %s73
      %p77 = scmp.eq.s32.totalorder %s16, 0
      %p78 = por %p76, %p77
      %p79 = scmp.ne.s32.totalorder %s71, %s73
      %p80 = scmp.eq.s32.totalorder %s21, 1
      %p81 = por %p79, %p80
      %p82 = scmp.ne.s32.totalorder %s73, %s74
      %p83 = scmp.eq.s32.totalorder %s21, 0
      %p84 = por %p82, %p83
      %p85 = scmp.ne.s32.totalorder %s73, %s74
      %p86 = scmp.eq.s32.totalorder %s22, 1
      %p87 = por %p85, %p86
      %p89 = scmp.ne.s32.totalorder %s74, %s88
      %p90 = scmp.eq.s32.totalorder %s22, 0
      %p91 = por %p89, %p90
      %s93 = sadd.s32 %s92, 1
      %p96 = scmp.eq.s32.totalorder %s16, 1
      %p97 = scmp.ne.s32.totalorder %s92, %s94
      %p98 = scmp.eq.s32.totalorder %s16, 0
      %p99 = por %p97, %p98
      %p100 = scmp.ne.s32.totalorder %s92, %s94
      %p101 = scmp.eq.s32.totalorder %s21, 1
      %p102 = por %p100, %p101
      %p103 = scmp.ne.s32.totalorder %s94, %s95
      %p104 = scmp.eq.s32.totalorder %s21, 0
      %p105 = por %p103, %p104
      %p106 = scmp.ne.s32.totalorder %s94, %s95
      %p107 = scmp.eq.s32.totalorder %s22, 1
      %p108 = por %p106, %p107
      %p110 = scmp.ne.s32.totalorder %s95, %s109
      %p111 = scmp.eq.s32.totalorder %s22, 0
      %p112 = por %p110, %p111
      %s114 = sadd.s32 %s113, 1
      %p117 = scmp.eq.s32.totalorder %s16, 1
      %p118 = scmp.ne.s32.totalorder %s113, %s115
      %p119 = scmp.eq.s32.totalorder %s16, 0
      %p120 = por %p118, %p119
      %p121 = scmp.ne.s32.totalorder %s113, %s115
      %p122 = scmp.eq.s32.totalorder %s21, 1
      %p123 = por %p121, %p122
      %p124 = scmp.ne.s32.totalorder %s115, %s116
      %p125 = scmp.eq.s32.totalorder %s21, 0
      %p126 = por %p124, %p125
      %p127 = scmp.ne.s32.totalorder %s115, %s116
      %p128 = scmp.eq.s32.totalorder %s22, 1
      %p129 = por %p127, %p128
      %p131 = scmp.ne.s32.totalorder %s116, %s130
      %p132 = scmp.eq.s32.totalorder %s22, 0
      %p133 = por %p131, %p132
      %s135 = sadd.s32 %s134, 1
      %p138 = scmp.eq.s32.totalorder %s16, 1
      %p139 = scmp.ne.s32.totalorder %s134, %s136
      %p140 = scmp.eq.s32.totalorder %s16, 0
      %p141 = por %p139, %p140
      %p142 = scmp.ne.s32.totalorder %s134, %s136
      %p143 = scmp.eq.s32.totalorder %s21, 1
      %p144 = por %p142, %p143
      %p145 = scmp.ne.s32.totalorder %s136, %s137
      %p146 = scmp.eq.s32.totalorder %s21, 0
      %p147 = por %p145, %p146
      %p148 = scmp.ne.s32.totalorder %s136, %s137
      %p149 = scmp.eq.s32.totalorder %s22, 1
      %p150 = por %p148, %p149
      %p152 = scmp.ne.s32.totalorder %s137, %s151
      %p153 = scmp.eq.s32.totalorder %s22, 0
      %p154 = por %p152, %p153
      %s156 = sadd.s32 %s155, 1
      %p159 = scmp.eq.s32.totalorder %s16, 1
      %p160 = scmp.ne.s32.totalorder %s155, %s157
      %p161 = scmp.eq.s32.totalorder %s16, 0
      %p162 = por %p160, %p161
      %p163 = scmp.ne.s32.totalorder %s155, %s157
      %p164 = scmp.eq.s32.totalorder %s21, 1
      %p165 = por %p163, %p164
      %p166 = scmp.ne.s32.totalorder %s157, %s158
      %p167 = scmp.eq.s32.totalorder %s21, 0
      %p168 = por %p166, %p167
      %p169 = scmp.ne.s32.totalorder %s157, %s158
      %p170 = scmp.eq.s32.totalorder %s22, 1
      %p171 = por %p169, %p170
      %p173 = scmp.ne.s32.totalorder %s158, %s172
      %p174 = scmp.eq.s32.totalorder %s22, 0
      %p175 = por %p173, %p174
      %s176 = ssub.s32 %s16, %s23
      %p177 = scmp.eq.s32.totalorder %s176, 0
      %s179 = sadd.s32 %s178, 1
      %s180 = scalar_select %p177, %s178, %s179
      %p183 = pneg %p177
      %p184 = scmp.eq.s32.totalorder %s16, 1
      %p185 = por %p183, %p184
      %p186 = scmp.ne.s32.totalorder %s178, %s181
      %p187 = scmp.eq.s32.totalorder %s16, 0
      %p188 = por %p186, %p187
      %p189 = scmp.ne.s32.totalorder %s178, %s181
      %p190 = scmp.eq.s32.totalorder %s21, 1
      %p191 = por %p189, %p190
      %p192 = scmp.ne.s32.totalorder %s181, %s182
      %p193 = scmp.eq.s32.totalorder %s21, 0
      %p194 = por %p192, %p193
      %p195 = scmp.ne.s32.totalorder %s181, %s182
      %p196 = scmp.eq.s32.totalorder %s22, 1
      %p197 = por %p195, %p196
      %p199 = scmp.ne.s32.totalorder %s182, %s198
      %p200 = scmp.eq.s32.totalorder %s22, 0
      %p201 = por %p199, %p200
      %p202 = scmp.le.s32.totalorder 1, %s16
      %p203 = scmp.lt.s32.totalorder %s16, 3
      %p204 = pnand %p202, %p203
      %p205 = pneg %p204
      // Predicated region
      $region9: #{tpu_custom_call.1} parent=5 // pred_check
        _
      $region10: #{tpu_custom_call.1} parent=5 // pred_check_branch
        %207 = sbr.rel (%p204) target = $region12
      $region11: #{tpu_custom_call.1} parent=5 // pred_region
        %s208 = ssub.s32 %s16, 1
        // Predicated region
        $region13: #{tpu_custom_call.1} parent=11 // pred_check
          %p209 = pneg %p63
        $region14: #{tpu_custom_call.1} parent=11 // pred_check_branch
          %211 = sbr.rel (%p209) target = $region16
        $region15: #{tpu_custom_call.1} parent=11 // pred_region
          _
        $region16: #{tpu_custom_call.1} parent=11 // pred_fallthru
          _
        // Predicated region
        $region17: #{tpu_custom_call.1} parent=11 // pred_check
          %p212 = pneg %p84
        $region18: #{tpu_custom_call.1} parent=11 // pred_check_branch
          %214 = sbr.rel (%p212) target = $region20
        $region19: #{tpu_custom_call.1} parent=11 // pred_region
          _
        $region20: #{tpu_custom_call.1} parent=11 // pred_fallthru
          _
        // Predicated region
        $region21: #{tpu_custom_call.1} parent=11 // pred_check
          %p215 = pneg %p105
        $region22: #{tpu_custom_call.1} parent=11 // pred_check_branch
          %217 = sbr.rel (%p215) target = $region24
        $region23: #{tpu_custom_call.1} parent=11 // pred_region
          _
        $region24: #{tpu_custom_call.1} parent=11 // pred_fallthru
          _
        // Predicated region
        $region25: #{tpu_custom_call.1} parent=11 // pred_check
          %p218 = pneg %p126
        $region26: #{tpu_custom_call.1} parent=11 // pred_check_branch
          %220 = sbr.rel (%p218) target = $region28
        $region27: #{tpu_custom_call.1} parent=11 // pred_region
          _
        $region28: #{tpu_custom_call.1} parent=11 // pred_fallthru
          _
        // Predicated region
        $region29: #{tpu_custom_call.1} parent=11 // pred_check
          %p221 = pneg %p147
        $region30: #{tpu_custom_call.1} parent=11 // pred_check_branch
          %223 = sbr.rel (%p221) target = $region32
        $region31: #{tpu_custom_call.1} parent=11 // pred_region
          _
        $region32: #{tpu_custom_call.1} parent=11 // pred_fallthru
          _
        // Predicated region
        $region33: #{tpu_custom_call.1} parent=11 // pred_check
          %p224 = pneg %p168
        $region34: #{tpu_custom_call.1} parent=11 // pred_check_branch
          %226 = sbr.rel (%p224) target = $region36
        $region35: #{tpu_custom_call.1} parent=11 // pred_region
          _
        $region36: #{tpu_custom_call.1} parent=11 // pred_fallthru
          _
      $region12: #{tpu_custom_call.1} parent=5 // pred_fallthru
        _
      %p227 = scmp.lt.s32.totalorder %s16, 2
      // Predicated region
      $region37: #{tpu_custom_call.1} parent=5 // pred_check
        %p228 = pneg %p227
      $region38: #{tpu_custom_call.1} parent=5 // pred_check_branch
        %230 = sbr.rel (%p228) target = $region40
      $region39: #{tpu_custom_call.1} parent=5 // pred_region
        // Predicated region
        $region41: #{tpu_custom_call.1} parent=39 // pred_check
          %p231 = pneg %p36
        $region42: #{tpu_custom_call.1} parent=39 // pred_check_branch
          %233 = sbr.rel (%p231) target = $region44
        $region43: #{tpu_custom_call.1} parent=39 // pred_region
          %s234 = smul.u32 2, %s16
          %p235 = scmp.lt.s32.totalorder %s234, 3
          %s236 = scalar_select %p235, %s234, 3
          %s237 = smul.addr %s236, 8
          %s238 = scalar_lea.vmem %s0, %s237
          %s239 = smul.u32 2, %s16
        $region44: #{tpu_custom_call.1} parent=39 // pred_fallthru
          _
      $region40: #{tpu_custom_call.1} parent=5 // pred_fallthru
        _
      %p240 = scmp.le.s32.totalorder 1, %s16
      %p241 = scmp.lt.s32.totalorder %s16, 3
      %p242 = pnand %p240, %p241
      %p243 = pneg %p242
      // Predicated region
      $region45: #{tpu_custom_call.1} parent=5 // pred_check
        _
      $region46: #{tpu_custom_call.1} parent=5 // pred_check_branch
        %245 = sbr.rel (%p242) target = $region48
      $region47: #{tpu_custom_call.1} parent=5 // pred_region
        %s246 = ssub.s32 %s16, 1
        %s247 = smul.u32 2, %s21
        %p248 = scmp.lt.s32.totalorder %s247, 3
        %s249 = scalar_select %p248, %s247, 3
        %s250 = smul.addr %s249, 8
        %s251 = scalar_lea.vmem %s0, %s250
        %p252 = pneg %p42
        %p253 = pneg %p39
        %p254 = pneg %p63
        %p255 = pneg %p60
        %p256 = pneg %p84
        %p257 = pneg %p81
        %p258 = pneg %p105
        %p259 = pneg %p102
        %p260 = pneg %p126
        %p261 = pneg %p123
        %p262 = pneg %p147
        %p263 = pneg %p144
        %p264 = pneg %p168
        %p265 = pneg %p165
        %p266 = pneg %p194
        %p267 = pneg %p191
        %s268 = sand.u32 %s181, 1
        %s269 = scalar_lea.sflag [#allocation3], %s268
        %s270 = sand.u32 %s181, 1
        %s271 = smul.addr %s270, 16
        %s272 = scalar_lea.vmem [#allocation2], %s271
        %s273 = smul.u32 2, %s21
        %p274 = scmp.lt.s32.totalorder %s273, 3
        %s275 = scalar_select %p274, %s273, 3
        %s276 = smul.addr %s275, 8
        %s277 = scalar_lea.vmem %s0, %s276
        %s278 = smul.u32 2, %s21
        %s279 = smul.u32 2, %s21
        %v281 = vld [vmem:[%s277] sm:$0xff]
        %v282 = vld [vmem:[%s277 + $0x8] sm:$0xff]
        %v283 = vld [vmem:[%s1] sm:$0x1]
        %v284 = vlaneseq
        %v285 = vshrl.u32 %v284, 7
        %v286 = vsub.s32 0, %v285
        %v287 = vrot.slane %v283, %v286
        %v288 = vmul.f32 %v281, %v287
        %v289 = vmul.f32 %v282, %v287
        %v290 = vld [vmem:[%s1 + $0x1] sm:$0x1]
        %v291 = vlaneseq
        %v292 = vshrl.u32 %v291, 7
        %v293 = vsub.s32 0, %v292
        %v294 = vrot.slane %v290, %v293
        %v295 = vadd.f32 %v288, %v294
        %v296 = vadd.f32 %v289, %v294
        %v297 = vmax.f32 %v295, 0.0
        %v298 = vmax.f32 %v296, 0.0
        %v299 = vpack.c.bf16 %v298, %v297
        %v300 = vld [vmem:[%s4] sm:$0xf]
        %v301 = vld [vmem:[%s4 + $0x4] sm:$0xf]
        %v302 = vld [vmem:[%s4 + $0x8] sm:$0xf]
        %v303 = vld [vmem:[%s4 + $0xc] sm:$0xf]
        %v304 = vld [vmem:[%s4 + $0x10] sm:$0xf]
        %v305 = vld [vmem:[%s4 + $0x14] sm:$0xf]
        %v306 = vld [vmem:[%s4 + $0x18] sm:$0xf]
        %v307 = vld [vmem:[%s4 + $0x1c] sm:$0xf]
        %v308 = vld [vmem:[%s4 + $0x20] sm:$0xf]
        %v309 = vld [vmem:[%s4 + $0x24] sm:$0xf]
        %v310 = vld [vmem:[%s4 + $0x28] sm:$0xf]
        %v311 = vld [vmem:[%s4 + $0x2c] sm:$0xf]
        %v312 = vld [vmem:[%s4 + $0x30] sm:$0xf]
        %v313 = vld [vmem:[%s4 + $0x34] sm:$0xf]
        %v314 = vld [vmem:[%s4 + $0x38] sm:$0xf]
        %v315 = vld [vmem:[%s4 + $0x3c] sm:$0xf]
        %v332 = vunpack.c.l.b16 %v300
        %v333 = vunpack.c.l.b16 %v301
        %v334 = vunpack.c.l.b16 %v302
        %v335 = vunpack.c.l.b16 %v303
        %v336 = vunpack.c.l.b16 %v304
        %v337 = vunpack.c.l.b16 %v305
        %v338 = vunpack.c.l.b16 %v306
        %v339 = vunpack.c.l.b16 %v307
        %v340 = vunpack.c.l.b16 %v308
        %v341 = vunpack.c.l.b16 %v309
        %v342 = vunpack.c.l.b16 %v310
        %v343 = vunpack.c.l.b16 %v311
        %v344 = vunpack.c.l.b16 %v312
        %v345 = vunpack.c.l.b16 %v313
        %v346 = vunpack.c.l.b16 %v314
        %v347 = vunpack.c.l.b16 %v315
        %v348 = vpack.c.b16 %v333, %v332
        %v349 = vpack.c.b16 %v335, %v334
        %v350 = vpack.c.b16 %v337, %v336
        %v351 = vpack.c.b16 %v339, %v338
        %v352 = vpack.c.b16 %v341, %v340
        %v353 = vpack.c.b16 %v343, %v342
        %v354 = vpack.c.b16 %v345, %v344
        %v355 = vpack.c.b16 %v347, %v346
        %364 = vmatprep.subr.bf16.mxu0 0
        %365 = vmatpush1.bf16.msra.mxu0 %v348
        %366 = vmatprep.subr.bf16.mxu0 0
        %367 = vmatpush1.bf16.msra.mxu0 %v349
        %368 = vmatprep.subr.bf16.mxu0 0
        %369 = vmatpush1.bf16.msra.mxu0 %v350
        %370 = vmatprep.subr.bf16.mxu0 0
        %371 = vmatpush1.bf16.msra.mxu0 %v351
        %372 = vmatprep.subr.bf16.mxu0 0
        %373 = vmatpush1.bf16.msra.mxu0 %v352
        %374 = vmatprep.subr.bf16.mxu0 0
        %375 = vmatpush1.bf16.msra.mxu0 %v353
        %376 = vmatprep.subr.bf16.mxu0 0
        %377 = vmatpush1.bf16.msra.mxu0 %v354
        %378 = vmatprep.subr.bf16.mxu0 0
        %379 = vmatpush1.bf16.msra.mxu0 %v355
        %380 = vmatprep.subr.bf16.mxu0 0
        %381 = vmatpush1.bf16.msra.mxu0 0
        %382 = vmatprep.subr.bf16.mxu0 0
        %383 = vmatpush1.bf16.msra.mxu0 0
        %384 = vmatprep.subr.bf16.mxu0 0
        %385 = vmatpush1.bf16.msra.mxu0 0
        %386 = vmatprep.subr.bf16.mxu0 0
        %387 = vmatpush1.bf16.msra.mxu0 0
        %388 = vmatprep.subr.bf16.mxu0 0
        %389 = vmatpush1.bf16.msra.mxu0 0
        %390 = vmatprep.subr.bf16.mxu0 0
        %391 = vmatpush1.bf16.msra.mxu0 0
        %392 = vmatprep.subr.bf16.mxu0 0
        %393 = vmatpush1.bf16.msra.mxu0 0
        %394 = vmatprep.subr.bf16.mxu0 0
        %395 = vmatpush1.bf16.msra.mxu0 0
        %396 = vmatprep.mubr.bf16.mxu0 0
        %397 = vmatmul.mubr.bf16.gmra.mrb[0].mxu0 %v299
        %v398 = vpop.f32.mrb[0].mxu0
        %v399 = vadd.f32 0.0, %v398
        %v400 = vpop.f32.mrb[0].mxu0
        %v401 = vpop.f32.mrb[0].mxu0
        %v402 = vadd.f32 0.0, %v401
        %v403 = vpop.f32.mrb[0].mxu0
        %404 = vdwg.mxu0
        %v405 = vld [vmem:[%s2] sm:$0x1]
        %v406 = vlaneseq
        %v407 = vshrl.u32 %v406, 7
        %v408 = vsub.s32 0, %v407
        %v409 = vrot.slane %v405, %v408
        %v410 = vmul.f32 %v399, %v409
        %v411 = vmul.f32 %v402, %v409
        %v412 = vld [vmem:[%s2 + $0x1] sm:$0x1]
        %v413 = vlaneseq
        %v414 = vshrl.u32 %v413, 7
        %v415 = vsub.s32 0, %v414
        %v416 = vrot.slane %v412, %v415
        %v417 = vadd.f32 %v410, %v416
        %v418 = vadd.f32 %v411, %v416
        %v419 = vmax.f32 %v417, 0.0
        %v420 = vmax.f32 %v418, 0.0
        %v421 = vlaneseq
        %v422 = vshrl.u32 %v421, 7
        %v423 = vadd.s32 %v422, 8
        %vm424 = vcmp.lt.s32.totalorder %v422, 0
        %v425 = vsub.s32 0, %v422
        %v426 = vsel %vm424, %v425, %v422
        %v427 = vshrl.u32 %v426, 4
        %v428 = vand.u32 %v426, 15
        %v429 = vsub.s32 0, %v428
        %v430 = vsel %vm424, %v429, %v428
        %vm431 = vcmp.lt.s32.totalorder %v423, 0
        %v432 = vsub.s32 0, %v423
        %v433 = vsel %vm431, %v432, %v423
        %v434 = vshrl.u32 %v433, 4
        %v435 = vand.u32 %v433, 15
        %v436 = vsub.s32 0, %v435
        %v437 = vsel %vm431, %v436, %v435
        %vm438 = vcmp.ne.s32.totalorder %v430, 0
        %vm439 = vcmp.ne.s32.totalorder %v437, 0
        %vm440 = vcmp.lt.s32.totalorder %v430, 0
        %vm441 = vcmp.lt.s32.totalorder %v437, 0
        %vm442 = vmand %vm440, %vm438
        %vm443 = vmand %vm441, %vm439
        %v444 = vadd.s32 %v430, 16
        %v445 = vadd.s32 %v437, 16
        %v446 = vsel %vm442, %v444, %v430
        %v447 = vsel %vm443, %v445, %v437
        %vm448 = vcmp.eq.s32.totalorder %v446, 0
        %vm449 = vcmp.eq.s32.totalorder %v447, 0
        %v450 = vrot.slane %v419, 7
        %v451 = vrot.slane %v420, 7
        %vm452 = vcmp.lt.s32.totalorder %v422, 1
        %v453 = vsel %vm452, %v450, %v451
        %v454 = vsel %vm452, %v451, %v450
        %v455 = vsel %vm448, 1, 0
        %v456 = vsel %vm449, 1, 0
        %vm457 = vcmp.eq.s32.totalorder %v455, 1
        %vm458 = vcmp.eq.s32.totalorder %v456, 1
        %v459 = vsel %vm457, 0.0, %v454
        %v460 = vsel %vm458, 0.0, %v453
        %vm461 = vcmp.eq.s32.totalorder %v446, 15
        %vm462 = vcmp.eq.s32.totalorder %v447, 15
        %v463 = vrot.slane %v419, 1
        %v464 = vrot.slane %v420, 1
        %vm465 = vcmp.lt.s32.totalorder %v422, 7
        %v466 = vsel %vm465, %v463, %v464
        %v467 = vsel %vm465, %v464, %v463
        %v468 = vsel %vm461, 1, 0
        %v469 = vsel %vm462, 1, 0
        %vm470 = vcmp.eq.s32.totalorder %v468, 1
        %vm471 = vcmp.eq.s32.totalorder %v469, 1
        %v472 = vsel %vm470, 0.0, %v466
        %v473 = vsel %vm471, 0.0, %v467
        %476 = vrot.lane.b32.xlu0 %v419, 64
        %v477 = vpop.permute.xlu0 %476
        %478 = vrot.lane.b32.xlu0 %v420, 64
        %v479 = vpop.permute.xlu0 %478
        %vm482 = vcmask 523264
        %v483 = vsel %vm482, %v459, %v477
        %v484 = vsel %vm482, %v460, %v479
        %v485 = vpack.c.bf16 %v484, %v483
        %v486 = vpack.c.bf16 %v473, %v472
        %v487 = vld [vmem:[%s5] sm:$0xf]
        %v488 = vld [vmem:[%s5 + $0x4] sm:$0xf]
        %v489 = vld [vmem:[%s5 + $0x8] sm:$0xf]
        %v490 = vld [vmem:[%s5 + $0xc] sm:$0xf]
        %v491 = vld [vmem:[%s5 + $0x10] sm:$0xf]
        %v492 = vld [vmem:[%s5 + $0x14] sm:$0xf]
        %v493 = vld [vmem:[%s5 + $0x18] sm:$0xf]
        %v494 = vld [vmem:[%s5 + $0x1c] sm:$0xf]
        %v495 = vld [vmem:[%s5 + $0x20] sm:$0xf]
        %v496 = vld [vmem:[%s5 + $0x24] sm:$0xf]
        %v497 = vld [vmem:[%s5 + $0x28] sm:$0xf]
        %v498 = vld [vmem:[%s5 + $0x2c] sm:$0xf]
        %v499 = vld [vmem:[%s5 + $0x30] sm:$0xf]
        %v500 = vld [vmem:[%s5 + $0x34] sm:$0xf]
        %v501 = vld [vmem:[%s5 + $0x38] sm:$0xf]
        %v502 = vld [vmem:[%s5 + $0x3c] sm:$0xf]
        %v503 = vld [vmem:[%s5 + $0x40] sm:$0xf]
        %v504 = vld [vmem:[%s5 + $0x44] sm:$0xf]
        %v505 = vld [vmem:[%s5 + $0x48] sm:$0xf]
        %v506 = vld [vmem:[%s5 + $0x4c] sm:$0xf]
        %v507 = vld [vmem:[%s5 + $0x50] sm:$0xf]
        %v508 = vld [vmem:[%s5 + $0x54] sm:$0xf]
        %v509 = vld [vmem:[%s5 + $0x58] sm:$0xf]
        %v510 = vld [vmem:[%s5 + $0x5c] sm:$0xf]
        %v535 = vunpack.c.l.b16 %v487
        %v536 = vunpack.c.l.b16 %v488
        %v537 = vunpack.c.l.b16 %v489
        %v538 = vunpack.c.l.b16 %v490
        %v539 = vunpack.c.l.b16 %v491
        %v540 = vunpack.c.l.b16 %v492
        %v541 = vunpack.c.l.b16 %v493
        %v542 = vunpack.c.l.b16 %v494
        %v543 = vunpack.c.l.b16 %v495
        %v544 = vunpack.c.l.b16 %v496
        %v545 = vunpack.c.l.b16 %v497
        %v546 = vunpack.c.l.b16 %v498
        %v547 = vunpack.c.l.b16 %v499
        %v548 = vunpack.c.l.b16 %v500
        %v549 = vunpack.c.l.b16 %v501
        %v550 = vunpack.c.l.b16 %v502
        %v551 = vunpack.c.l.b16 %v503
        %v552 = vunpack.c.l.b16 %v504
        %v553 = vunpack.c.l.b16 %v505
        %v554 = vunpack.c.l.b16 %v506
        %v555 = vunpack.c.l.b16 %v507
        %v556 = vunpack.c.l.b16 %v508
        %v557 = vunpack.c.l.b16 %v509
        %v558 = vunpack.c.l.b16 %v510
        %v559 = vpack.c.b16 %v536, %v535
        %v560 = vpack.c.b16 %v538, %v537
        %v561 = vpack.c.b16 %v540, %v539
        %v562 = vpack.c.b16 %v542, %v541
        %v563 = vpack.c.b16 %v544, %v543
        %v564 = vpack.c.b16 %v546, %v545
        %v565 = vpack.c.b16 %v548, %v547
        %v566 = vpack.c.b16 %v550, %v549
        %v567 = vpack.c.b16 %v552, %v551
        %v568 = vpack.c.b16 %v554, %v553
        %v569 = vpack.c.b16 %v556, %v555
        %v570 = vpack.c.b16 %v558, %v557
        %v584 = vsel %vm482, %v486, 0
        %586 = vmatprep.subr.bf16.mxu0 0
        %587 = vmatpush1.bf16.msra.mxu0 %v559
        %588 = vmatprep.subr.bf16.mxu0 0
        %589 = vmatpush1.bf16.msra.mxu0 %v560
        %590 = vmatprep.subr.bf16.mxu0 0
        %591 = vmatpush1.bf16.msra.mxu0 %v561
        %592 = vmatprep.subr.bf16.mxu0 0
        %593 = vmatpush1.bf16.msra.mxu0 %v562
        %594 = vmatprep.subr.bf16.mxu0 0
        %595 = vmatpush1.bf16.msra.mxu0 %v563
        %596 = vmatprep.subr.bf16.mxu0 0
        %597 = vmatpush1.bf16.msra.mxu0 %v564
        %598 = vmatprep.subr.bf16.mxu0 0
        %599 = vmatpush1.bf16.msra.mxu0 %v565
        %600 = vmatprep.subr.bf16.mxu0 0
        %601 = vmatpush1.bf16.msra.mxu0 %v566
        %602 = vmatprep.subr.bf16.mxu0 0
        %603 = vmatpush1.bf16.msra.mxu0 %v567
        %604 = vmatprep.subr.bf16.mxu0 0
        %605 = vmatpush1.bf16.msra.mxu0 %v568
        %606 = vmatprep.subr.bf16.mxu0 0
        %607 = vmatpush1.bf16.msra.mxu0 %v569
        %608 = vmatprep.subr.bf16.mxu0 0
        %609 = vmatpush1.bf16.msra.mxu0 %v570
        %610 = vmatprep.subr.bf16.mxu0 0
        %611 = vmatpush1.bf16.msra.mxu0 0
        %612 = vmatprep.subr.bf16.mxu0 0
        %613 = vmatpush1.bf16.msra.mxu0 0
        %614 = vmatprep.subr.bf16.mxu0 0
        %615 = vmatpush1.bf16.msra.mxu0 0
        %616 = vmatprep.subr.bf16.mxu0 0
        %617 = vmatpush1.bf16.msra.mxu0 0
        %618 = vmatprep.mubr.bf16.mxu0 %v584
        %619 = vmatmul.mubr.bf16.gmra.mrb[0].mxu0 %v485
        %v620 = vpop.f32.mrb[0].mxu0
        %v621 = vadd.f32 0.0, %v620
        %v622 = vpop.f32.mrb[0].mxu0
        %v623 = vpop.f32.mrb[0].mxu0
        %v624 = vadd.f32 0.0, %v623
        %v625 = vpop.f32.mrb[0].mxu0
        %626 = vdwg.mxu0
        %v627 = vld [vmem:[%s2 + $0x2] sm:$0x1]
        %v628 = vlaneseq
        %v629 = vshrl.u32 %v628, 7
        %v630 = vsub.s32 0, %v629
        %v631 = vrot.slane %v627, %v630
        %v632 = vmul.f32 %v621, %v631
        %v633 = vmul.f32 %v624, %v631
        %v634 = vld [vmem:[%s2 + $0x3] sm:$0x1]
        %v635 = vlaneseq
        %v636 = vshrl.u32 %v635, 7
        %v637 = vsub.s32 0, %v636
        %v638 = vrot.slane %v634, %v637
        %v639 = vadd.f32 %v632, %v638
        %v640 = vadd.f32 %v633, %v638
        %v641 = vmax.f32 %v639, 0.0
        %v642 = vmax.f32 %v640, 0.0
        %v643 = vpack.c.bf16 %v642, %v641
        %v644 = vld [vmem:[%s6] sm:$0xf]
        %v645 = vld [vmem:[%s6 + $0x4] sm:$0xf]
        %v646 = vld [vmem:[%s6 + $0x8] sm:$0xf]
        %v647 = vld [vmem:[%s6 + $0xc] sm:$0xf]
        %v648 = vld [vmem:[%s6 + $0x10] sm:$0xf]
        %v649 = vld [vmem:[%s6 + $0x14] sm:$0xf]
        %v650 = vld [vmem:[%s6 + $0x18] sm:$0xf]
        %v651 = vld [vmem:[%s6 + $0x1c] sm:$0xf]
        %v652 = vld [vmem:[%s3] sm:$0x1]
        %v654 = vlaneseq
        %v655 = vshrl.u32 %v654, 7
        %v656 = vsub.s32 0, %v655
        %v657 = vrot.slane %v652, %v656
        %v667 = vunpack.c.l.b16 %v644
        %v668 = vunpack.c.l.b16 %v645
        %v669 = vunpack.c.l.b16 %v646
        %v670 = vunpack.c.l.b16 %v647
        %v671 = vunpack.c.l.b16 %v648
        %v672 = vunpack.c.l.b16 %v649
        %v673 = vunpack.c.l.b16 %v650
        %v674 = vunpack.c.l.b16 %v651
        %v675 = vpack.c.b16 %v668, %v667
        %v676 = vpack.c.b16 %v670, %v669
        %v677 = vpack.c.b16 %v672, %v671
        %v678 = vpack.c.b16 %v674, %v673
        %v684 = vsel %vm482, %v643, 0
        %686 = vmatprep.subr.bf16.mxu0 0
        %687 = vmatpush1.bf16.msra.mxu0 %v675
        %688 = vmatprep.subr.bf16.mxu0 0
        %689 = vmatpush1.bf16.msra.mxu0 %v676
        %690 = vmatprep.subr.bf16.mxu0 0
        %691 = vmatpush1.bf16.msra.mxu0 %v677
        %692 = vmatprep.subr.bf16.mxu0 0
        %693 = vmatpush1.bf16.msra.mxu0 %v678
        %694 = vmatprep.subr.bf16.mxu0 0
        %695 = vmatpush1.bf16.msra.mxu0 0
        %696 = vmatprep.subr.bf16.mxu0 0
        %697 = vmatpush1.bf16.msra.mxu0 0
        %698 = vmatprep.subr.bf16.mxu0 0
        %699 = vmatpush1.bf16.msra.mxu0 0
        %700 = vmatprep.subr.bf16.mxu0 0
        %701 = vmatpush1.bf16.msra.mxu0 0
        %702 = vmatprep.subr.bf16.mxu0 0
        %703 = vmatpush1.bf16.msra.mxu0 0
        %704 = vmatprep.subr.bf16.mxu0 0
        %705 = vmatpush1.bf16.msra.mxu0 0
        %706 = vmatprep.subr.bf16.mxu0 0
        %707 = vmatpush1.bf16.msra.mxu0 0
        %708 = vmatprep.subr.bf16.mxu0 0
        %709 = vmatpush1.bf16.msra.mxu0 0
        %710 = vmatprep.subr.bf16.mxu0 0
        %711 = vmatpush1.bf16.msra.mxu0 0
        %712 = vmatprep.subr.bf16.mxu0 0
        %713 = vmatpush1.bf16.msra.mxu0 0
        %714 = vmatprep.subr.bf16.mxu0 0
        %715 = vmatpush1.bf16.msra.mxu0 0
        %716 = vmatprep.subr.bf16.mxu0 0
        %717 = vmatpush1.bf16.msra.mxu0 0
        %718 = vmatprep.mubr.bf16.mxu0 0
        %719 = vmatmul.mubr.bf16.gmra.mrb[0].mxu0 %v684
        %v720 = vpop.f32.mrb[0].mxu0
        %v721 = vadd.f32 %v657, %v720
        %v722 = vpop.f32.mrb[0].mxu0
        %v723 = vpop.f32.mrb[0].mxu0
        %v724 = vadd.f32 %v657, %v723
        %v725 = vpop.f32.mrb[0].mxu0
        %726 = vdwg.mxu0
        %v727 = vadd.f32 %v721, %v281
        %v728 = vadd.f32 %v724, %v282
        %729 = vst [vmem:[%s272] sm:$0xff] %v727
        %730 = vst [vmem:[%s272 + $0x8] sm:$0xff] %v728
        %s731 = sand.u32 %s181, 1
        %s732 = scalar_lea.sflag [#allocation3], %s731
        %s733 = sand.u32 %s181, 1
        %s734 = smul.addr %s733, 16
        %s735 = scalar_lea.vmem [#allocation2], %s734
        // Predicated region
        $region49: #{tpu_custom_call.1} parent=47 // pred_check
          %p736 = pneg %p191
        $region50: #{tpu_custom_call.1} parent=47 // pred_check_branch
          %738 = sbr.rel (%p736) target = $region52
        $region51: #{tpu_custom_call.1} parent=47 // pred_region
          %s739 = smul.u32 2, %s21
          %s741 = ssub.s32 256, 256
          %742 = vsyncadd %s732, %s741
          %s743 = smul.addr %s739, 128
          %s744 = scalar_lea.hbm %s7, %s743
          %s745 = sshll.u32 %s735, 4
          %s746 = int_to_ptr.vmem [resolvable:$true] %s745
          %751 = dma.vmem_to_hbm [thread:$0]  %s746, 256, %s744, %s732, 128, 128, 8
        $region52: #{tpu_custom_call.1} parent=47 // pred_fallthru
          _
      $region48: #{tpu_custom_call.1} parent=5 // pred_fallthru
        _
      %p752 = scmp.le.s32.totalorder 2, %s16
      // Predicated region
      $region53: #{tpu_custom_call.1} parent=5 // pred_check
        %p753 = pneg %p752
      $region54: #{tpu_custom_call.1} parent=5 // pred_check_branch
        %755 = sbr.rel (%p753) target = $region56
      $region55: #{tpu_custom_call.1} parent=5 // pred_region
        %s756 = ssub.s32 %s16, 2
        // Predicated region
        $region57: #{tpu_custom_call.1} parent=55 // pred_check
          %p757 = pneg %p197
        $region58: #{tpu_custom_call.1} parent=55 // pred_check_branch
          %759 = sbr.rel (%p757) target = $region60
        $region59: #{tpu_custom_call.1} parent=55 // pred_region
          %s760 = sand.u32 %s182, 1
          %s761 = scalar_lea.sflag [#allocation3], %s760
          %s762 = sand.u32 %s182, 1
          %s763 = smul.addr %s762, 16
          %s764 = scalar_lea.vmem [#allocation2], %s763
          %765 = dma.done %s761, 256
        $region60: #{tpu_custom_call.1} parent=55 // pred_fallthru
          _
      $region56: #{tpu_custom_call.1} parent=5 // pred_fallthru
        _
    $region6: #{tpu_custom_call.1} parent=1 // loop_footer
      %s20 = sadd.s32 1, %s16
    $region7: #{tpu_custom_call.1} parent=1 // loop_footer_branch
      %15 = sbr.rel target = $region3
    $region8: #{tpu_custom_call.1} parent=1 // loop_exit
      _
    %766 = vsyncpa [#allocation3], 1
    %s767 = scalar_lea.sflag [#allocation3], 1
    %768 = vsyncpa %s767, 1

</llo_original>
